<compile_context>
chip_gen: v6e
topology: v6e:2x2x1
jax: 0.10.0
libtpu: 0.0.40
codegen_flags: <defaults>
</compile_context>

<pallas_src>
import functools

import jax
import jax.numpy as jnp
from jax.experimental import pallas as pl
from jax.experimental.pallas import tpu as pltpu


def _ce2d_kernel(logits_ref, labels_ref, out_ref, *, hw):
    """Per tile: nll = logsumexp_C(x) - x[target], index-masked, folded to a
    128-lane partial written to this step's (1,1,1,128) output block."""
    x = logits_ref[...]                              # (1, C, T) native dtype
    lab = labels_ref[...].astype(jnp.int32)          # (1, 1, T)
    _, C, T = x.shape

    # Numerically stable logsumexp over the class (sublane) axis.  max and the
    # subtraction stay in the input dtype (packed bf16 on v6e/v7x); exp/log
    # and the class-sum accumulate in f32.
    m = jnp.max(x, axis=1, keepdims=True)                                # (1,1,T)
    e = jnp.exp((x - m).astype(jnp.float32))                             # (1,C,T)
    lse = m.astype(jnp.float32) + jnp.log(jnp.sum(e, axis=1, keepdims=True))

    # Gather x[target] with an iota-compare + select (no dynamic gather on
    # TPU, no bool->f32 convert / multiply).  At most one class matches per
    # pixel, so the class-sum is an exact selection.
    classes = jax.lax.broadcasted_iota(jnp.int32, x.shape, 1)            # (1,C,T)
    picked = jnp.sum(jnp.where(classes == lab, x, 0.0),
                     axis=1, keepdims=True).astype(jnp.float32)          # (1,1,T)

    # Mask lanes past the true pixel count (partial edge blocks carry garbage
    # in the tail).  A select, not a multiply, so NaN/inf garbage cannot leak.
    lane = jax.lax.broadcasted_iota(jnp.int32, (1, 1, T), 2)
    valid = (pl.program_id(1) * T + lane) < hw
    nll = jnp.where(valid, lse - picked, 0.0)                            # (1,1,T)

    # Fold the per-pixel vector lane-wise (pairwise tree of VALU adds across
    # the T/128 vregs) into one 128-lane partial; the cross-lane reduce
    # happens in the wrapper.
    chunks = [nll[:, :, i * 128:(i + 1) * 128] for i in range(T // 128)]
    while len(chunks) > 1:
        nxt = [a + b for a, b in zip(chunks[0::2], chunks[1::2])]
        if len(chunks) % 2:
            nxt.append(chunks[-1])
        chunks = nxt
    out_ref[...] = chunks[0].reshape(out_ref.shape)


# --- tile-size selection -----------------------------------------------------
_TARGET_TILE_BYTES = 6 * 1024 * 1024    # ~4-8 MiB of logits per tile
_VMEM_BUDGET_BYTES = 24 * 1024 * 1024   # conservative working-set cap (v7x ok)
_VMEM_LIMIT_BYTES = 48 * 1024 * 1024    # scoped VMEM limit, safe on v5e/v6e/v7x
_MAX_TILE_LANES = 64 * 1024             # bounds the trace-time lane-fold unroll


def _pick_tile_lanes(n, c, hw, logit_bytes, label_bytes):
    t_target = _TARGET_TILE_BYTES // max(1, c * logit_bytes)
    # double-buffered inputs + ~4 f32-sized (C,T) temps + per-pixel scalars
    per_lane = c * (2 * logit_bytes + 16) + 2 * label_bytes + 48
    t_budget = _VMEM_BUDGET_BYTES // per_lane
    hw_lanes = pl.cdiv(hw, 128) * 128
    t = min(t_target, t_budget, hw_lanes, _MAX_TILE_LANES)
    t = max(128, (t // 128) * 128)
    # Keep >= 2 grid steps when possible so the "parallel" axes can shard
    # across both v7x TensorCores.
    if n * pl.cdiv(hw, t) < 2 and hw > 128:
        t = max(128, pl.cdiv(hw, 2 * 128) * 128)
    return t


def cross_entropy_loss_2d(outputs, targets):
    """Equivalent of CrossEntropyLoss2d()(outputs, targets) with weight=None.

    outputs: (N, C, H, W) float (any float dtype; f32 accumulation in-kernel)
    targets: (N, H, W) integer class indices in [0, C)
    returns: scalar float32 mean NLL over all N*H*W pixels
    """
    N, C, H, W = outputs.shape
    HW = H * W

    # Free reshapes of the contiguous layouts; no padding, no dtype passes.
    x = outputs.reshape(N, C, HW)
    t = targets.reshape(N, 1, HW)
    if (not jnp.issubdtype(t.dtype, jnp.integer)) or jnp.dtype(t.dtype).itemsize > 4:
        t = t.astype(jnp.int32)          # narrow int labels pass through as-is

    logit_bytes = jnp.dtype(x.dtype).itemsize
    label_bytes = jnp.dtype(t.dtype).itemsize
    T = _pick_tile_lanes(N, C, HW, logit_bytes, label_bytes)
    num_t = pl.cdiv(HW, T)

    partials = pl.pallas_call(
        functools.partial(_ce2d_kernel, hw=HW),
        out_shape=jax.ShapeDtypeStruct((N, num_t, 1, 128), jnp.float32),
        grid=(N, num_t),
        in_specs=[
            pl.BlockSpec((1, C, T), lambda n, j: (n, 0, j)),   # logits tile
            pl.BlockSpec((1, 1, T), lambda n, j: (n, 0, j)),   # labels tile
        ],
        # one lane-dense 128-wide partial per grid step (no shared accumulator)
        out_specs=pl.BlockSpec((1, 1, 1, 128), lambda n, j: (n, j, 0, 0)),
        compiler_params=pltpu.CompilerParams(
            dimension_semantics=("parallel", "parallel"),
            vmem_limit_bytes=_VMEM_LIMIT_BYTES,
        ),
    )(x, t)

    # Final reduction + mean in the wrapper.  NLLLoss(weight=None,
    # reduction='mean') divides by the number of pixels.
    total = jnp.sum(partials)
    return total / jnp.float32(N * HW)


def _reference(outputs, targets):
    """Pure-JAX reference: F.nll_loss(F.log_softmax(outputs, 1), targets)."""
    logp = jax.nn.log_softmax(outputs.astype(jnp.float32), axis=1)  # (N,C,H,W)
    picked = jnp.take_along_axis(
        logp, targets[:, None, :, :].astype(jnp.int32), axis=1)[:, 0]
    return -jnp.mean(picked)


if __name__ == "__main__":
    key = jax.random.PRNGKey(0)
    k1, k2, k3, k4 = jax.random.split(key, 4)

    # Case 1: canonical small shapes (f32 logits, int32 labels).
    N, C, H, W = 2, 4, 16, 16
    outputs = jax.random.normal(k1, (N, C, H, W), dtype=jnp.float32)
    targets = jax.random.randint(k2, (N, H, W), 0, C, dtype=jnp.int32)
    loss = jax.block_until_ready(cross_entropy_loss_2d(outputs, targets))
    ref = _reference(outputs, targets)
    assert jnp.allclose(loss, ref, atol=1e-5, rtol=1e-5), (loss, ref)

    # Case 2: ragged H*W (not a multiple of 128) -> partial edge blocks + mask.
    N2, C2, H2, W2 = 1, 5, 9, 17
    out2 = jax.random.normal(k3, (N2, C2, H2, W2), dtype=jnp.float32)
    tgt2 = jax.random.randint(k4, (N2, H2, W2), 0, C2, dtype=jnp.int32)
    loss2 = jax.block_until_ready(cross_entropy_loss_2d(out2, tgt2))
    ref2 = _reference(out2, tgt2)
    assert jnp.allclose(loss2, ref2, atol=1e-5, rtol=1e-5), (loss2, ref2)

    # Case 3: bf16 logits + int16 labels (native-dtype compute path).
    out3 = outputs.astype(jnp.bfloat16)
    tgt3 = targets.astype(jnp.int16)
    loss3 = jax.block_until_ready(cross_entropy_loss_2d(out3, tgt3))
    ref3 = _reference(out3, tgt3)
    assert jnp.allclose(loss3, ref3, atol=3e-2, rtol=3e-2), (loss3, ref3)

    print("KERNEL_OK")
</pallas_src>

<mosaic_0001>
module attributes {stable_mosaic.version = 11 : i64} {
  func.func @_ce2d_kernel(%arg0: i32, %arg1: i32, %arg2: memref<1x4x256xf32, #tpu.memory_space<vmem>>, %arg3: memref<1x1x256xi32, #tpu.memory_space<vmem>>, %arg4: memref<1x1x1x128xf32, #tpu.memory_space<vmem>>) attributes {dimension_semantics = [#tpu.dimension_semantics<parallel>, #tpu.dimension_semantics<parallel>], iteration_bounds = array<i64: 2, 1>, scalar_prefetch = 0 : i64, scratch_operands = 0 : i64, tpu.core_type = #tpu.core_type<tc>, window_params = [{transform_indices = @transform_0, window_bounds = array<i64: 1, 4, 256>}, {transform_indices = @transform_1, window_bounds = array<i64: 1, 1, 256>}, {transform_indices = @transform_2, window_bounds = array<i64: 1, 1, 1, 128>}]} {
    %c0 = arith.constant 0 : index
    %c0_0 = arith.constant 0 : index
    %c0_1 = arith.constant 0 : index
    %0 = vector.load %arg2[%c0, %c0_0, %c0_1] : memref<1x4x256xf32, #tpu.memory_space<vmem>>, vector<1x4x256xf32>
    %c0_2 = arith.constant 0 : index
    %c0_3 = arith.constant 0 : index
    %c0_4 = arith.constant 0 : index
    %1 = vector.load %arg3[%c0_2, %c0_3, %c0_4] : memref<1x1x256xi32, #tpu.memory_space<vmem>>, vector<1x1x256xi32>
    %cst = arith.constant dense<0xFF800000> : vector<1x256xf32>
    %2 = vector.multi_reduction <maximumf>, %0, %cst [1] : vector<1x4x256xf32> to vector<1x256xf32>
    %3 = vector.shape_cast %2 : vector<1x256xf32> to vector<1x1x256xf32>
    %4 = vector.broadcast %3 : vector<1x1x256xf32> to vector<1x4x256xf32>
    %5 = arith.subf %0, %4 : vector<1x4x256xf32>
    %6 = math.exp %5 : vector<1x4x256xf32>
    %cst_5 = arith.constant dense<0.000000e+00> : vector<1x256xf32>
    %7 = vector.multi_reduction <add>, %6, %cst_5 [1] : vector<1x4x256xf32> to vector<1x256xf32>
    %8 = vector.shape_cast %7 : vector<1x256xf32> to vector<1x1x256xf32>
    %9 = math.log %8 : vector<1x1x256xf32>
    %10 = arith.addf %3, %9 : vector<1x1x256xf32>
    %11 = tpu.iota {dimensions = array<i32: 1>} : vector<1x4x256xi32>
    %12 = vector.broadcast %1 : vector<1x1x256xi32> to vector<1x4x256xi32>
    %13 = arith.cmpi eq, %11, %12 : vector<1x4x256xi32>
    %cst_6 = arith.constant 0.000000e+00 : f32
    %14 = vector.broadcast %cst_6 : f32 to vector<1x4x256xf32>
    %15 = arith.select %13, %0, %14 : vector<1x4x256xi1>, vector<1x4x256xf32>
    %cst_7 = arith.constant dense<0.000000e+00> : vector<1x256xf32>
    %16 = vector.multi_reduction <add>, %15, %cst_7 [1] : vector<1x4x256xf32> to vector<1x256xf32>
    %17 = vector.shape_cast %16 : vector<1x256xf32> to vector<1x1x256xf32>
    %18 = tpu.iota {dimensions = array<i32: 2>} : vector<1x1x256xi32>
    %c256_i32 = arith.constant 256 : i32
    %19 = arith.muli %arg1, %c256_i32 : i32
    %20 = vector.broadcast %19 : i32 to vector<1x1x256xi32>
    %21 = arith.addi %20, %18 : vector<1x1x256xi32>
    %c256_i32_8 = arith.constant 256 : i32
    %22 = vector.broadcast %c256_i32_8 : i32 to vector<1x1x256xi32>
    %23 = arith.cmpi slt, %21, %22 : vector<1x1x256xi32>
    %24 = arith.subf %10, %17 : vector<1x1x256xf32>
    %cst_9 = arith.constant 0.000000e+00 : f32
    %25 = vector.broadcast %cst_9 : f32 to vector<1x1x256xf32>
    %26 = arith.select %23, %24, %25 : vector<1x1x256xi1>, vector<1x1x256xf32>
    %27 = vector.extract_strided_slice %26 {offsets = [0, 0, 0], sizes = [1, 1, 128], strides = [1, 1, 1]} : vector<1x1x256xf32> to vector<1x1x128xf32>
    %28 = vector.extract_strided_slice %26 {offsets = [0, 0, 128], sizes = [1, 1, 128], strides = [1, 1, 1]} : vector<1x1x256xf32> to vector<1x1x128xf32>
    %29 = arith.addf %27, %28 : vector<1x1x128xf32>
    %30 = vector.shape_cast %29 : vector<1x1x128xf32> to vector<1x1x1x128xf32>
    %c0_10 = arith.constant 0 : index
    %c0_11 = arith.constant 0 : index
    %c0_12 = arith.constant 0 : index
    %c0_13 = arith.constant 0 : index
    %31 = vector.load %arg4[%c0_10, %c0_11, %c0_12, %c0_13] : memref<1x1x1x128xf32, #tpu.memory_space<vmem>>, vector<1x1x1x128xf32>
    tpu.vector_store %arg4[%c0_10, %c0_11, %c0_12, %c0_13], %30 {strides = array<i32>} : memref<1x1x1x128xf32, #tpu.memory_space<vmem>>, vector<1x1x1x128xf32>,
    return
  }
  func.func @transform_0(%arg0: i32, %arg1: i32) -> (i32, i32, i32) {
    %c0_i32 = arith.constant 0 : i32
    %c0_i32_0 = arith.constant 0 : i32
    return %arg0, %c0_i32, %arg1 : i32, i32, i32
  }
  func.func @transform_1(%arg0: i32, %arg1: i32) -> (i32, i32, i32) {
    %c0_i32 = arith.constant 0 : i32
    %c0_i32_0 = arith.constant 0 : i32
    return %arg0, %c0_i32, %arg1 : i32, i32, i32
  }
  func.func @transform_2(%arg0: i32, %arg1: i32) -> (i32, i32, i32, i32) {
    %c0_i32 = arith.constant 0 : i32
    %c0_i32_0 = arith.constant 0 : i32
    %c0_i32_1 = arith.constant 0 : i32
    return %arg0, %arg1, %c0_i32, %c0_i32_0 : i32, i32, i32, i32
  }
}

</mosaic_0001>

<llo_original>
// kernel: tpu_custom_call.1
$region0: #{tpu_custom_call.1}
  #allocation0 [shape = 'u32[]', space=smem, size = 0x4, offset = 0x4, fixed_abs, tag = 'smem constant byte address 0x4 - core index']
  #allocation1 [shape = 'u32[144,128]{1,0:T(1,128)}', space=vmem, size = 0x12000, scoped, tag = 'internal scratch']
  %s0 = inlined_call_operand.hbm [shape: f32[2,4,256], index: 0, kind: input, shape index: {}]
  %s1 = inlined_call_operand.hbm [shape: s32[2,1,256], index: 1, kind: input, shape index: {}]
  %s2 = inlined_call_operand.hbm [shape: f32[2,1,1,128], index: 2, kind: output, shape index: {}]
  %s3 = sld [smem:[#allocation0]]
  $region49: #{tpu_custom_call.1} parent=0
    _
  %s5 = ssub.s32 1, %s3
  %s6 = scalar_select 0, %s5, %s3
  $region1: #{tpu_custom_call.1} parent=0
    #allocation2 [shape = 'u8[8192]{0}', space=vmem, size = 0x2000, scoped, tag = 'input window, operand 0']
    #allocation3 [shape = 's32[2]{0}', space=sflag, size = 0x8, scoped, tag = 'scoped memory for tpu_custom_call.1']
    #allocation4 [shape = 's32[2]{0}', space=sflag, size = 0x8, scoped, tag = 'scoped memory for tpu_custom_call.1']
    #allocation5 [shape = 'u8[2048]{0}', space=vmem, size = 0x800, scoped, tag = 'input window, operand 1']
    #allocation6 [shape = 's32[2]{0}', space=sflag, size = 0x8, scoped, tag = 'scoped memory for tpu_custom_call.1']
    #allocation7 [shape = 'u8[1024]{0}', space=vmem, size = 0x400, scoped, tag = 'output window, operand 0']
    %7 = vsyncpa [#allocation3], 0
    %s8 = scalar_lea.sflag [#allocation3], 1
    %9 = vsyncpa %s8, 0
    %10 = vsyncpa [#allocation6], 0
    %s11 = scalar_lea.sflag [#allocation6], 1
    %12 = vsyncpa %s11, 0
    %13 = vsyncpa [#allocation4], 0
    %s14 = scalar_lea.sflag [#allocation4], 1
    %15 = vsyncpa %s14, 0
    loop: start=0, step=1, limit=4
    $region2: #{tpu_custom_call.1} parent=1 // loop_pre_header
      _
    $region3: #{tpu_custom_call.1} parent=1 // loop_header
      %s17 = sphi 0, %s21
      %p18 = scmp.ge.s32.totalorder %s17, 4
      %s24 = sphi 0, %s36
      %s25 = sphi 0, %s32
      %s26 = sphi 0, %s24
      %s27 = sphi 0, %s25
      %s28 = sphi 0, %s26
      %s29 = sphi 0, %s27
      %s41 = sphi 0, %s43
      %s44 = sphi 0, %s41
      %s45 = sphi 0, %s44
      %s61 = sphi 0, %s45
      %s69 = sphi 0, %s71
      %s72 = sphi 0, %s69
      %s73 = sphi 0, %s72
      %s89 = sphi 0, %s73
      %s97 = sphi 0, %s99
      %s100 = sphi 0, %s97
      %s101 = sphi 0, %s100
      %s117 = sphi 0, %s101
    $region4: #{tpu_custom_call.1} parent=1 // loop_header_branch
      %20 = sbr.rel (%p18) target = $region8
    $region5: #{tpu_custom_call.1} parent=1 // loop_body
      %s22 = ssub.s32 %s17, 1
      %s23 = ssub.s32 %s17, 2
      %s30 = sadd.s32 1, %s25
      %p31 = scmp.ge.s32.totalorder %s30, 1
      %s32 = scalar_select %p31, 0, %s30
      %s33 = sadd.s32 1, %s24
      %s34 = scalar_select %p31, %s33, %s24
      %p35 = scmp.ge.s32.totalorder %s34, 2
      %s36 = scalar_select %p35, 0, %s34
      %s37 = ssub.s32 %s24, %s36
      %s38 = ssub.s32 %s25, %s32
      %s39 = sor.u32 %s37, %s38
      %p40 = scmp.eq.s32.totalorder %s39, 0
      %s42 = sadd.s32 %s41, 1
      %s43 = scalar_select %p40, %s41, %s42
      %p46 = pneg %p40
      %p47 = scmp.eq.s32.totalorder %s17, 1
      %p48 = por %p46, %p47
      %p49 = scmp.ne.s32.totalorder %s41, %s44
      %p50 = scmp.eq.s32.totalorder %s17, 0
      %p51 = por %p49, %p50
      %p52 = scmp.ne.s32.totalorder %s41, %s44
      %p53 = scmp.eq.s32.totalorder %s22, 1
      %p54 = por %p52, %p53
      %p55 = scmp.ne.s32.totalorder %s44, %s45
      %p56 = scmp.eq.s32.totalorder %s22, 0
      %p57 = por %p55, %p56
      %p58 = scmp.ne.s32.totalorder %s44, %s45
      %p59 = scmp.eq.s32.totalorder %s23, 1
      %p60 = por %p58, %p59
      %p62 = scmp.ne.s32.totalorder %s45, %s61
      %p63 = scmp.eq.s32.totalorder %s23, 0
      %p64 = por %p62, %p63
      %s65 = ssub.s32 %s24, %s36
      %s66 = ssub.s32 %s25, %s32
      %s67 = sor.u32 %s65, %s66
      %p68 = scmp.eq.s32.totalorder %s67, 0
      %s70 = sadd.s32 %s69, 1
      %s71 = scalar_select %p68, %s69, %s70
      %p74 = pneg %p68
      %p75 = scmp.eq.s32.totalorder %s17, 1
      %p76 = por %p74, %p75
      %p77 = scmp.ne.s32.totalorder %s69, %s72
      %p78 = scmp.eq.s32.totalorder %s17, 0
      %p79 = por %p77, %p78
      %p80 = scmp.ne.s32.totalorder %s69, %s72
      %p81 = scmp.eq.s32.totalorder %s22, 1
      %p82 = por %p80, %p81
      %p83 = scmp.ne.s32.totalorder %s72, %s73
      %p84 = scmp.eq.s32.totalorder %s22, 0
      %p85 = por %p83, %p84
      %p86 = scmp.ne.s32.totalorder %s72, %s73
      %p87 = scmp.eq.s32.totalorder %s23, 1
      %p88 = por %p86, %p87
      %p90 = scmp.ne.s32.totalorder %s73, %s89
      %p91 = scmp.eq.s32.totalorder %s23, 0
      %p92 = por %p90, %p91
      %s93 = ssub.s32 %s24, %s36
      %s94 = ssub.s32 %s25, %s32
      %s95 = sor.u32 %s93, %s94
      %p96 = scmp.eq.s32.totalorder %s95, 0
      %s98 = sadd.s32 %s97, 1
      %s99 = scalar_select %p96, %s97, %s98
      %p102 = pneg %p96
      %p103 = scmp.eq.s32.totalorder %s17, 1
      %p104 = por %p102, %p103
      %p105 = scmp.ne.s32.totalorder %s97, %s100
      %p106 = scmp.eq.s32.totalorder %s17, 0
      %p107 = por %p105, %p106
      %p108 = scmp.ne.s32.totalorder %s97, %s100
      %p109 = scmp.eq.s32.totalorder %s22, 1
      %p110 = por %p108, %p109
      %p111 = scmp.ne.s32.totalorder %s100, %s101
      %p112 = scmp.eq.s32.totalorder %s22, 0
      %p113 = por %p111, %p112
      %p114 = scmp.ne.s32.totalorder %s100, %s101
      %p115 = scmp.eq.s32.totalorder %s23, 1
      %p116 = por %p114, %p115
      %p118 = scmp.ne.s32.totalorder %s101, %s117
      %p119 = scmp.eq.s32.totalorder %s23, 0
      %p120 = por %p118, %p119
      %p121 = scmp.le.s32.totalorder 1, %s17
      %p122 = scmp.lt.s32.totalorder %s17, 3
      %p123 = pnand %p121, %p122
      %p124 = pneg %p123
      // Predicated region
      $region9: #{tpu_custom_call.1} parent=5 // pred_check
        _
      $region10: #{tpu_custom_call.1} parent=5 // pred_check_branch
        %126 = sbr.rel (%p123) target = $region12
      $region11: #{tpu_custom_call.1} parent=5 // pred_region
        %s127 = ssub.s32 %s17, 1
      $region12: #{tpu_custom_call.1} parent=5 // pred_fallthru
        _
      %p128 = scmp.lt.s32.totalorder %s17, 2
      // Predicated region
      $region13: #{tpu_custom_call.1} parent=5 // pred_check
        %p129 = pneg %p128
      $region14: #{tpu_custom_call.1} parent=5 // pred_check_branch
        %131 = sbr.rel (%p129) target = $region16
      $region15: #{tpu_custom_call.1} parent=5 // pred_region
        // Predicated region
        $region17: #{tpu_custom_call.1} parent=15 // pred_check
          %p132 = pneg %p51
        $region18: #{tpu_custom_call.1} parent=15 // pred_check_branch
          %134 = sbr.rel (%p132) target = $region20
        $region19: #{tpu_custom_call.1} parent=15 // pred_region
          %s135 = sand.u32 %s41, 1
          %s136 = scalar_lea.sflag [#allocation3], %s135
          %s137 = sand.u32 %s41, 1
          %s138 = smul.addr %s137, 8
          %s139 = scalar_lea.vmem [#allocation2], %s138
          %s140 = smul.u32 2, %s25
          %s142 = ssub.s32 128, 128
          %143 = vsyncadd %s136, %s142
          %s144 = smul.addr %s24, 2
          %s145 = sadd.s32 %s140, %s144
          %s146 = smul.addr %s145, 64
          %s147 = scalar_lea.hbm %s0, %s146
          %s149 = sshll.u32 %s139, 4
          %s150 = int_to_ptr.vmem [resolvable:$true] %s149
          %152 = dma.hbm_to_vmem [thread:$0]  %s147, 128, %s150, %s136
        $region20: #{tpu_custom_call.1} parent=15 // pred_fallthru
          _
        // Predicated region
        $region21: #{tpu_custom_call.1} parent=15 // pred_check
          %p153 = pneg %p79
        $region22: #{tpu_custom_call.1} parent=15 // pred_check_branch
          %155 = sbr.rel (%p153) target = $region24
        $region23: #{tpu_custom_call.1} parent=15 // pred_region
          %s156 = sand.u32 %s69, 1
          %s157 = scalar_lea.sflag [#allocation6], %s156
          %s158 = sand.u32 %s69, 1
          %s159 = smul.addr %s158, 2
          %s160 = scalar_lea.vmem [#allocation5], %s159
          %s161 = smul.u32 2, %s25
          %s163 = ssub.s32 32, 32
          %164 = vsyncadd %s157, %s163
          %s165 = smul.addr %s24, 2
          %s166 = sadd.s32 %s161, %s165
          %s167 = smul.addr %s166, 16
          %s168 = scalar_lea.hbm %s1, %s167
          %s170 = sshll.u32 %s160, 4
          %s171 = int_to_ptr.vmem [resolvable:$true] %s170
          %173 = dma.hbm_to_vmem [thread:$0]  %s168, 32, %s171, %s157
        $region24: #{tpu_custom_call.1} parent=15 // pred_fallthru
          _
      $region16: #{tpu_custom_call.1} parent=5 // pred_fallthru
        _
      %p174 = scmp.le.s32.totalorder 1, %s17
      %p175 = scmp.lt.s32.totalorder %s17, 3
      %p176 = pnand %p174, %p175
      %p177 = pneg %p176
      // Predicated region
      $region25: #{tpu_custom_call.1} parent=5 // pred_check
        _
      $region26: #{tpu_custom_call.1} parent=5 // pred_check_branch
        %179 = sbr.rel (%p176) target = $region28
      $region27: #{tpu_custom_call.1} parent=5 // pred_region
        %s180 = ssub.s32 %s17, 1
        %s181 = sand.u32 %s44, 1
        %s182 = scalar_lea.sflag [#allocation3], %s181
        %s183 = sand.u32 %s44, 1
        %s184 = smul.addr %s183, 8
        %s185 = scalar_lea.vmem [#allocation2], %s184
        // Predicated region
        $region29: #{tpu_custom_call.1} parent=27 // pred_check
          %p186 = pneg %p57
        $region30: #{tpu_custom_call.1} parent=27 // pred_check_branch
          %188 = sbr.rel (%p186) target = $region32
        $region31: #{tpu_custom_call.1} parent=27 // pred_region
          %189 = dma.done %s182, 128
        $region32: #{tpu_custom_call.1} parent=27 // pred_fallthru
          _
        %s190 = sand.u32 %s72, 1
        %s191 = scalar_lea.sflag [#allocation6], %s190
        %s192 = sand.u32 %s72, 1
        %s193 = smul.addr %s192, 2
        %s194 = scalar_lea.vmem [#allocation5], %s193
        // Predicated region
        $region33: #{tpu_custom_call.1} parent=27 // pred_check
          %p195 = pneg %p85
        $region34: #{tpu_custom_call.1} parent=27 // pred_check_branch
          %197 = sbr.rel (%p195) target = $region36
        $region35: #{tpu_custom_call.1} parent=27 // pred_region
          %198 = dma.done %s191, 32
        $region36: #{tpu_custom_call.1} parent=27 // pred_fallthru
          _
        %s199 = sand.u32 %s44, 1
        %s200 = scalar_lea.sflag [#allocation3], %s199
        %s201 = sand.u32 %s44, 1
        %s202 = smul.addr %s201, 8
        %s203 = scalar_lea.vmem [#allocation2], %s202
        %p204 = pneg %p57
        %p205 = pneg %p54
        %s206 = sand.u32 %s72, 1
        %s207 = scalar_lea.sflag [#allocation6], %s206
        %s208 = sand.u32 %s72, 1
        %s209 = smul.addr %s208, 2
        %s210 = scalar_lea.vmem [#allocation5], %s209
        %p211 = pneg %p85
        %p212 = pneg %p82
        %p213 = pneg %p113
        %p214 = pneg %p110
        %s215 = sand.u32 %s100, 1
        %s216 = scalar_lea.sflag [#allocation4], %s215
        %s217 = sand.u32 %s100, 1
        %s218 = scalar_lea.vmem [#allocation7], %s217
        %s219 = smul.u32 2, %s27
        %s220 = smul.u32 2, %s27
        %v221 = vld [vmem:[%s185] sm:$0xff]
        %v222 = vld [vmem:[%s194] sm:$0x3]
        %v224 = vcombine.high %v221, %v221
        %vm226 = vcmask 1043456
        %v227 = vsel %vm226, %v221, -inf
        %v228 = vrot.slane %v227, 4
        %v229 = vmax.f32 %v227, %v228
        %v230 = vrot.slane %v229, 2
        %v231 = vmax.f32 %v229, %v230
        %v232 = vrot.slane %v231, 1
        %v233 = vmax.f32 %v231, %v232
        %v234 = vsel %vm226, %v224, -inf
        %v235 = vrot.slane %v234, 4
        %v236 = vmax.f32 %v234, %v235
        %v237 = vrot.slane %v236, 2
        %v238 = vmax.f32 %v236, %v237
        %v239 = vrot.slane %v238, 1
        %v240 = vmax.f32 %v238, %v239
        %v243 = vcombine.low %v233, %v240
        %v245 = vsub.f32 %v221, %v243
        %v246 = vmul.f32 %v245, 1.442695
        %v247 = vpow.pop %v246
        %v249 = vcombine.high %v247, %v247
        %v251 = vsel %vm226, %v247, 0.0
        %v252 = vrot.slane %v251, 4
        %v253 = vadd.f32 %v251, %v252
        %v254 = vrot.slane %v253, 2
        %v255 = vadd.f32 %v253, %v254
        %v256 = vrot.slane %v255, 1
        %v257 = vadd.f32 %v255, %v256
        %v258 = vsel %vm226, %v249, 0.0
        %v259 = vrot.slane %v258, 4
        %v260 = vadd.f32 %v258, %v259
        %v261 = vrot.slane %v260, 2
        %v262 = vadd.f32 %v260, %v261
        %v263 = vrot.slane %v262, 1
        %v264 = vadd.f32 %v262, %v263
        %v265 = vlog2.pop %v257
        %v266 = vmul.f32 %v265, 0.6931472
        %v267 = vlog2.pop %v264
        %v268 = vmul.f32 %v267, 0.6931472
        %v269 = vadd.f32 %v233, %v266
        %v270 = vadd.f32 %v240, %v268
        %v271 = vlaneseq
        %v272 = vshrl.u32 %v271, 7
        %v273 = vlaneseq
        %v274 = vshrl.u32 %v273, 7
        %v275 = vsub.s32 0, %v274
        %v276 = vrot.slane %v222, %v275
        %v277 = vlaneseq
        %v278 = vshrl.u32 %v277, 7
        %v279 = vsub.s32 1, %v278
        %v280 = vrot.slane %v222, %v279
        %vm281 = vcmp.eq.s32.totalorder %v272, %v276
        %vm282 = vcmp.eq.s32.totalorder %v272, %v280
        %v283 = vsel %vm281, %v221, 0.0
        %v284 = vsel %vm282, %v224, 0.0
        %v285 = vsel %vm226, %v283, 0.0
        %v286 = vrot.slane %v285, 4
        %v287 = vadd.f32 %v285, %v286
        %v288 = vrot.slane %v287, 2
        %v289 = vadd.f32 %v287, %v288
        %v290 = vrot.slane %v289, 1
        %v291 = vadd.f32 %v289, %v290
        %v292 = vsel %vm226, %v284, 0.0
        %v293 = vrot.slane %v292, 4
        %v294 = vadd.f32 %v292, %v293
        %v295 = vrot.slane %v294, 2
        %v296 = vadd.f32 %v294, %v295
        %v297 = vrot.slane %v296, 1
        %v298 = vadd.f32 %v296, %v297
        %v299 = vlaneseq
        %v300 = vand.u32 %v299, 127
        %v301 = vadd.s32 %v300, 128
        %s302 = smul.u32 %s27, 256
        %v303 = vstv %s302
        %v304 = vadd.s32 %v303, %v300
        %v305 = vadd.s32 %v303, %v301
        %vm306 = vcmp.lt.s32.totalorder %v304, 256
        %vm307 = vcmp.lt.s32.totalorder %v305, 256
        %v308 = vsub.f32 %v269, %v291
        %v309 = vsub.f32 %v270, %v298
        %v310 = vsel %vm306, %v308, 0.0
        %v311 = vsel %vm307, %v309, 0.0
        %v312 = vadd.f32 %v310, %v311
        %313 = vst [vmem:[%s218] sm:$0x1] %v312
        %s314 = sand.u32 %s100, 1
        %s315 = scalar_lea.sflag [#allocation4], %s314
        %s316 = sand.u32 %s100, 1
        %s317 = scalar_lea.vmem [#allocation7], %s316
        // Predicated region
        $region37: #{tpu_custom_call.1} parent=27 // pred_check
          %p318 = pneg %p110
        $region38: #{tpu_custom_call.1} parent=27 // pred_check_branch
          %320 = sbr.rel (%p318) target = $region40
        $region39: #{tpu_custom_call.1} parent=27 // pred_region
          %s322 = ssub.s32 16, 16
          %323 = vsyncadd %s315, %s322
          %s324 = sadd.s32 %s27, %s26
          %s325 = smul.addr %s324, 16
          %s326 = scalar_lea.hbm %s2, %s325
          %s328 = sshll.u32 %s317, 4
          %s329 = int_to_ptr.vmem [resolvable:$true] %s328
          %331 = dma.vmem_to_hbm [thread:$0]  %s329, 16, %s326, %s315
        $region40: #{tpu_custom_call.1} parent=27 // pred_fallthru
          _
      $region28: #{tpu_custom_call.1} parent=5 // pred_fallthru
        _
      %p332 = scmp.le.s32.totalorder 2, %s17
      // Predicated region
      $region41: #{tpu_custom_call.1} parent=5 // pred_check
        %p333 = pneg %p332
      $region42: #{tpu_custom_call.1} parent=5 // pred_check_branch
        %335 = sbr.rel (%p333) target = $region44
      $region43: #{tpu_custom_call.1} parent=5 // pred_region
        %s336 = ssub.s32 %s17, 2
        // Predicated region
        $region45: #{tpu_custom_call.1} parent=43 // pred_check
          %p337 = pneg %p116
        $region46: #{tpu_custom_call.1} parent=43 // pred_check_branch
          %339 = sbr.rel (%p337) target = $region48
        $region47: #{tpu_custom_call.1} parent=43 // pred_region
          %s340 = sand.u32 %s101, 1
          %s341 = scalar_lea.sflag [#allocation4], %s340
          %s342 = sand.u32 %s101, 1
          %s343 = scalar_lea.vmem [#allocation7], %s342
          %344 = dma.done %s341, 16
        $region48: #{tpu_custom_call.1} parent=43 // pred_fallthru
          _
      $region44: #{tpu_custom_call.1} parent=5 // pred_fallthru
        _
    $region6: #{tpu_custom_call.1} parent=1 // loop_footer
      %s21 = sadd.s32 1, %s17
    $region7: #{tpu_custom_call.1} parent=1 // loop_footer_branch
      %16 = sbr.rel target = $region3
    $region8: #{tpu_custom_call.1} parent=1 // loop_exit
      _
    %345 = vsyncpa [#allocation3], 1
    %s346 = scalar_lea.sflag [#allocation3], 1
    %347 = vsyncpa %s346, 1
    %348 = vsyncpa [#allocation6], 1
    %s349 = scalar_lea.sflag [#allocation6], 1
    %350 = vsyncpa %s349, 1
    %351 = vsyncpa [#allocation4], 1
    %s352 = scalar_lea.sflag [#allocation4], 1
    %353 = vsyncpa %s352, 1

</llo_original>
